<compile_context>
chip_gen: v7x
topology: tpu7x:2x2x1
jax: 0.10.0
libtpu: 0.0.40
codegen_flags: <defaults>
</compile_context>

<pallas_src>
import functools
import math

import jax
import jax.numpy as jnp
from jax import lax
from jax.experimental import pallas as pl
from jax.experimental.pallas import tpu as pltpu


def _swish(x, ex_beta_row):
    # PyTorch Swish with ex_beta = 1 + beta pre-folded: x * sigmoid(ex_beta * x)
    return x * jax.nn.sigmoid(ex_beta_row * x)


def _batchnorm_train(x, eps=1e-5):
    # nn.BatchNorm1d(affine=False), training mode: batch mean, biased batch var.
    # Two-pass stats (centered sum of squares) to avoid E[x^2]-E[x]^2 cancellation.
    n = x.shape[0]
    inv_n = 1.0 / n
    mean = jnp.sum(x, axis=0, keepdims=True) * inv_n
    centered = x - mean
    var = jnp.sum(centered * centered, axis=0, keepdims=True) * inv_n
    return centered * lax.rsqrt(var + eps)


def fcdecoder_kernel(z_ref, w_ref, vec_ref, out_ref, *, use_bf16_matmuls=False):
    B, Kp = z_ref.shape                 # z padded to Kp columns (ones in pad)
    D = out_ref.shape[1]
    Hp = w_ref.shape[0] - Kp            # lane-dense hidden width
    mx = jnp.bfloat16 if use_bf16_matmuls else jnp.float32

    # Packed per-feature vectors: [ ex_beta1 | b2 | ex_beta2 | b3 ]
    eb1 = vec_ref[:, 0 * Hp:1 * Hp]
    b2 = vec_ref[:, 1 * Hp:2 * Hp]
    eb2 = vec_ref[:, 2 * Hp:3 * Hp]
    b3 = vec_ref[:, 3 * Hp:3 * Hp + D]

    # Packed weight slab: rows [0, Kp) = augmented w1 (bias row folded in),
    #                     rows [Kp, Kp+Hp) = [ w2 | w3 ].
    w1 = w_ref[0:Kp, 0:Hp]
    w2 = w_ref[Kp:Kp + Hp, 0:Hp]
    w3 = w_ref[Kp:Kp + Hp, Hp:Hp + D]

    # Layer 1: Linear(nstyle -> hidden), bias folded into the MXU dot via ones column.
    h = jnp.dot(z_ref[...], w1, preferred_element_type=jnp.float32)
    h = _batchnorm_train(_swish(h, eb1))

    # Layer 2: Linear(hidden -> hidden) on the MXU (f32 accumulation always).
    h = jnp.dot(h.astype(mx), w2.astype(mx),
                preferred_element_type=jnp.float32) + b2
    h = _batchnorm_train(_swish(h, eb2))

    # Layer 3: Linear(hidden -> dim_out) + ReLU (last-layer activation).
    h = jnp.dot(h.astype(mx), w3.astype(mx),
                preferred_element_type=jnp.float32) + b3
    out_ref[...] = jnp.maximum(h, 0.0)


def fc_decoder_forward(z, params, use_bf16_matmuls=False):
    """z: (B, nstyle) float32. params: dict of logical (unpadded) arrays (init_params)."""
    B, nstyle = z.shape
    hidden = params["w1"].shape[1]
    dim_out = params["w3"].shape[1]

    # Lane-dense hidden width (zero-padding is semantics preserving, see header).
    Hp = ((hidden + 127) // 128) * 128
    pad_h = Hp - hidden
    # Layer-1 contraction width: nstyle inputs + 1 ones-column (bias), sublane aligned.
    Kp = max(8, ((nstyle + 1 + 7) // 8) * 8)

    # z padded with ONES: column nstyle multiplies the folded b1 row, the remaining
    # pad columns hit all-zero w1_aug rows, so the dot equals z @ w1 + b1 exactly.
    z_p = jnp.pad(z.astype(jnp.float32), ((0, 0), (0, Kp - nstyle)),
                  constant_values=1.0)                                   # (B, Kp)

    # Single packed weight slab: [[ w1 ; b1 ; 0 ] | 0 ]  over  [ w2 | w3 ].
    w1_aug = jnp.concatenate(
        [params["w1"], params["b1"],
         jnp.zeros((Kp - nstyle - 1, hidden), jnp.float32)], axis=0)     # (Kp, hidden)
    w1_blk = jnp.pad(w1_aug, ((0, 0), (0, pad_h + dim_out)))             # (Kp, Hp+D)
    w2_blk = jnp.pad(params["w2"], ((0, pad_h), (0, pad_h)))             # (Hp, Hp)
    w3_blk = jnp.pad(params["w3"], ((0, pad_h), (0, 0)))                 # (Hp, D)
    w_slab = jnp.concatenate(
        [w1_blk, jnp.concatenate([w2_blk, w3_blk], axis=1)], axis=0)     # (Kp+Hp, Hp+D)

    def pad_row(v):
        return jnp.pad(v, ((0, 0), (0, pad_h)))

    # Single packed slab of per-feature vectors; ex_beta = 1 + beta pre-folded.
    vec = jnp.concatenate(
        [pad_row(1.0 + params["beta1"]),
         pad_row(params["b2"]),
         pad_row(1.0 + params["beta2"]),
         params["b3"]],
        axis=1)                                                          # (1, 3*Hp + D)

    kernel = functools.partial(fcdecoder_kernel, use_bf16_matmuls=use_bf16_matmuls)
    args = (z_p, w_slab, vec)
    vmem = pltpu.MemorySpace.VMEM
    return pl.pallas_call(
        kernel,
        out_shape=jax.ShapeDtypeStruct((B, dim_out), jnp.float32),
        in_specs=[pl.BlockSpec(memory_space=vmem) for _ in args],
        out_specs=pl.BlockSpec(memory_space=vmem),
    )(*args)


def init_params(key, nstyle=5, hidden=64, dim_out=256):
    """Deterministic init mimicking PyTorch defaults (U(-1/sqrt(fan_in), 1/sqrt(fan_in)))."""
    ks = jax.random.split(key, 6)

    def linear(kw, kb, fan_in, fan_out):
        bound = 1.0 / math.sqrt(fan_in)
        w = jax.random.uniform(kw, (fan_in, fan_out), jnp.float32, -bound, bound)
        b = jax.random.uniform(kb, (1, fan_out), jnp.float32, -bound, bound)
        return w, b

    w1, b1 = linear(ks[0], ks[1], nstyle, hidden)
    w2, b2 = linear(ks[2], ks[3], hidden, hidden)
    w3, b3 = linear(ks[4], ks[5], hidden, dim_out)

    # Swish(num_parameters=hidden, init=1.0): beta filled with 1.0*4.0 - 1.0 = 3.0
    beta1 = jnp.full((1, hidden), 3.0, dtype=jnp.float32)
    beta2 = jnp.full((1, hidden), 3.0, dtype=jnp.float32)

    return dict(w1=w1, b1=b1, beta1=beta1,
                w2=w2, b2=b2, beta2=beta2,
                w3=w3, b3=b3)


def fc_decoder_reference(z, p):
    """Pure-JAX reference of the same forward pass (two-pass BN, plain matmuls)."""
    def swish(x, beta):
        return x * jax.nn.sigmoid((1.0 + beta) * x)

    def bn(x, eps=1e-5):
        mean = jnp.mean(x, axis=0, keepdims=True)
        var = jnp.mean((x - mean) ** 2, axis=0, keepdims=True)
        return (x - mean) * lax.rsqrt(var + eps)

    h = z @ p["w1"] + p["b1"]
    h = bn(swish(h, p["beta1"]))
    h = h @ p["w2"] + p["b2"]
    h = bn(swish(h, p["beta2"]))
    h = h @ p["w3"] + p["b3"]
    return jnp.maximum(h, 0.0)


if __name__ == "__main__":
    B, NSTYLE, HIDDEN, DIM_OUT = 8, 5, 64, 256

    key = jax.random.PRNGKey(0)
    k_z, k_p = jax.random.split(key)
    z = jax.random.normal(k_z, (B, NSTYLE), dtype=jnp.float32)
    params = init_params(k_p, nstyle=NSTYLE, hidden=HIDDEN, dim_out=DIM_OUT)

    out = jax.block_until_ready(fc_decoder_forward(z, params))
    ref = jax.block_until_ready(fc_decoder_reference(z, params))

    assert out.shape == (B, DIM_OUT)
    # Slightly relaxed vs the pure-VPU variant: layer-1 now goes through the MXU
    # (multi-pass f32), whose rounding differs marginally from the XLA reference dot.
    assert jnp.allclose(out, ref, atol=5e-4, rtol=5e-4), "mismatch vs reference"

    print("KERNEL_OK")
</pallas_src>

<mosaic_0001>
module attributes {stable_mosaic.version = 11 : i64} {
  func.func @fcdecoder_kernel(%arg0: memref<8x8xf32, #tpu.memory_space<vmem>>, %arg1: memref<136x384xf32, #tpu.memory_space<vmem>>, %arg2: memref<1x640xf32, #tpu.memory_space<vmem>>, %arg3: memref<8x256xf32, #tpu.memory_space<vmem>>) attributes {dimension_semantics = [], scalar_prefetch = 0 : i64, scratch_operands = 0 : i64, tpu.core_type = #tpu.core_type<tc>} {
    %c0 = arith.constant 0 : index
    %c0_0 = arith.constant 0 : index
    %0 = vector.load %arg2[%c0, %c0_0] : memref<1x640xf32, #tpu.memory_space<vmem>>, vector<1x128xf32>
    %c0_1 = arith.constant 0 : index
    %c128 = arith.constant 128 : index
    %1 = vector.load %arg2[%c0_1, %c128] : memref<1x640xf32, #tpu.memory_space<vmem>>, vector<1x128xf32>
    %c0_2 = arith.constant 0 : index
    %c256 = arith.constant 256 : index
    %2 = vector.load %arg2[%c0_2, %c256] : memref<1x640xf32, #tpu.memory_space<vmem>>, vector<1x128xf32>
    %c0_3 = arith.constant 0 : index
    %c384 = arith.constant 384 : index
    %3 = vector.load %arg2[%c0_3, %c384] : memref<1x640xf32, #tpu.memory_space<vmem>>, vector<1x256xf32>
    %c0_4 = arith.constant 0 : index
    %c0_5 = arith.constant 0 : index
    %4 = vector.load %arg1[%c0_4, %c0_5] : memref<136x384xf32, #tpu.memory_space<vmem>>, vector<8x128xf32>
    %c8 = arith.constant 8 : index
    %c0_6 = arith.constant 0 : index
    %5 = vector.load %arg1[%c8, %c0_6] : memref<136x384xf32, #tpu.memory_space<vmem>>, vector<128x128xf32>
    %c8_7 = arith.constant 8 : index
    %c128_8 = arith.constant 128 : index
    %6 = vector.load %arg1[%c8_7, %c128_8] : memref<136x384xf32, #tpu.memory_space<vmem>>, vector<128x256xf32>
    %c0_9 = arith.constant 0 : index
    %c0_10 = arith.constant 0 : index
    %7 = vector.load %arg0[%c0_9, %c0_10] : memref<8x8xf32, #tpu.memory_space<vmem>>, vector<8x8xf32>
    %cst = arith.constant dense<0.000000e+00> : vector<8x128xf32>
    %8 = tpu.matmul %7, %4, %cst {dimension_numbers = #tpu.dot_dimension_numbers<[1], [0], [0], [1], [0, 0, 1, 1], [], []>} : vector<8x8xf32>, vector<8x128xf32>, vector<8x128xf32> -> vector<8x128xf32>
    %9 = vector.broadcast %0 : vector<1x128xf32> to vector<8x128xf32>
    %10 = arith.mulf %9, %8 : vector<8x128xf32>
    %11 = arith.negf %10 : vector<8x128xf32>
    %12 = math.exp %11 : vector<8x128xf32>
    %cst_11 = arith.constant 1.000000e+00 : f32
    %13 = vector.broadcast %cst_11 : f32 to vector<8x128xf32>
    %14 = arith.addf %13, %12 : vector<8x128xf32>
    %15 = arith.divf %13, %14 : vector<8x128xf32>
    %16 = arith.mulf %8, %15 : vector<8x128xf32>
    %cst_12 = arith.constant dense<0.000000e+00> : vector<128xf32>
    %17 = vector.multi_reduction <add>, %16, %cst_12 [0] : vector<8x128xf32> to vector<128xf32>
    %18 = vector.shape_cast %17 : vector<128xf32> to vector<1x128xf32>
    %cst_13 = arith.constant 1.250000e-01 : f32
    %19 = vector.broadcast %cst_13 : f32 to vector<1x128xf32>
    %20 = arith.mulf %18, %19 : vector<1x128xf32>
    %21 = vector.broadcast %20 : vector<1x128xf32> to vector<8x128xf32>
    %22 = arith.subf %16, %21 : vector<8x128xf32>
    %23 = arith.mulf %22, %22 : vector<8x128xf32>
    %cst_14 = arith.constant dense<0.000000e+00> : vector<128xf32>
    %24 = vector.multi_reduction <add>, %23, %cst_14 [0] : vector<8x128xf32> to vector<128xf32>
    %25 = vector.shape_cast %24 : vector<128xf32> to vector<1x128xf32>
    %cst_15 = arith.constant 1.250000e-01 : f32
    %26 = vector.broadcast %cst_15 : f32 to vector<1x128xf32>
    %27 = arith.mulf %25, %26 : vector<1x128xf32>
    %cst_16 = arith.constant 9.99999974E-6 : f32
    %28 = vector.broadcast %cst_16 : f32 to vector<1x128xf32>
    %29 = arith.addf %27, %28 : vector<1x128xf32>
    %30 = math.rsqrt %29 : vector<1x128xf32>
    %31 = vector.broadcast %30 : vector<1x128xf32> to vector<8x128xf32>
    %32 = arith.mulf %22, %31 : vector<8x128xf32>
    %cst_17 = arith.constant dense<0.000000e+00> : vector<8x128xf32>
    %33 = tpu.matmul %32, %5, %cst_17 {dimension_numbers = #tpu.dot_dimension_numbers<[1], [0], [0], [1], [0, 0, 1, 1], [], []>} : vector<8x128xf32>, vector<128x128xf32>, vector<8x128xf32> -> vector<8x128xf32>
    %34 = vector.broadcast %1 : vector<1x128xf32> to vector<8x128xf32>
    %35 = arith.addf %33, %34 : vector<8x128xf32>
    %36 = vector.broadcast %2 : vector<1x128xf32> to vector<8x128xf32>
    %37 = arith.mulf %36, %35 : vector<8x128xf32>
    %38 = arith.negf %37 : vector<8x128xf32>
    %39 = math.exp %38 : vector<8x128xf32>
    %cst_18 = arith.constant 1.000000e+00 : f32
    %40 = vector.broadcast %cst_18 : f32 to vector<8x128xf32>
    %41 = arith.addf %40, %39 : vector<8x128xf32>
    %42 = arith.divf %40, %41 : vector<8x128xf32>
    %43 = arith.mulf %35, %42 : vector<8x128xf32>
    %cst_19 = arith.constant dense<0.000000e+00> : vector<128xf32>
    %44 = vector.multi_reduction <add>, %43, %cst_19 [0] : vector<8x128xf32> to vector<128xf32>
    %45 = vector.shape_cast %44 : vector<128xf32> to vector<1x128xf32>
    %cst_20 = arith.constant 1.250000e-01 : f32
    %46 = vector.broadcast %cst_20 : f32 to vector<1x128xf32>
    %47 = arith.mulf %45, %46 : vector<1x128xf32>
    %48 = vector.broadcast %47 : vector<1x128xf32> to vector<8x128xf32>
    %49 = arith.subf %43, %48 : vector<8x128xf32>
    %50 = arith.mulf %49, %49 : vector<8x128xf32>
    %cst_21 = arith.constant dense<0.000000e+00> : vector<128xf32>
    %51 = vector.multi_reduction <add>, %50, %cst_21 [0] : vector<8x128xf32> to vector<128xf32>
    %52 = vector.shape_cast %51 : vector<128xf32> to vector<1x128xf32>
    %cst_22 = arith.constant 1.250000e-01 : f32
    %53 = vector.broadcast %cst_22 : f32 to vector<1x128xf32>
    %54 = arith.mulf %52, %53 : vector<1x128xf32>
    %cst_23 = arith.constant 9.99999974E-6 : f32
    %55 = vector.broadcast %cst_23 : f32 to vector<1x128xf32>
    %56 = arith.addf %54, %55 : vector<1x128xf32>
    %57 = math.rsqrt %56 : vector<1x128xf32>
    %58 = vector.broadcast %57 : vector<1x128xf32> to vector<8x128xf32>
    %59 = arith.mulf %49, %58 : vector<8x128xf32>
    %cst_24 = arith.constant dense<0.000000e+00> : vector<8x256xf32>
    %60 = tpu.matmul %59, %6, %cst_24 {dimension_numbers = #tpu.dot_dimension_numbers<[1], [0], [0], [1], [0, 0, 1, 1], [], []>} : vector<8x128xf32>, vector<128x256xf32>, vector<8x256xf32> -> vector<8x256xf32>
    %61 = vector.broadcast %3 : vector<1x256xf32> to vector<8x256xf32>
    %62 = arith.addf %60, %61 : vector<8x256xf32>
    %cst_25 = arith.constant 0.000000e+00 : f32
    %63 = vector.broadcast %cst_25 : f32 to vector<8x256xf32>
    %64 = arith.maximumf %62, %63 : vector<8x256xf32>
    %c0_26 = arith.constant 0 : index
    %c0_27 = arith.constant 0 : index
    %65 = vector.load %arg3[%c0_26, %c0_27] : memref<8x256xf32, #tpu.memory_space<vmem>>, vector<8x256xf32>
    tpu.vector_store %arg3[%c0_26, %c0_27], %64 {strides = array<i32>} : memref<8x256xf32, #tpu.memory_space<vmem>>, vector<8x256xf32>,
    return
  }
}

</mosaic_0001>

<llo_original>
// kernel: tpu_custom_call.1
$region0: #{tpu_custom_call.1}
  #allocation0 [shape = 'u32[]', space=smem, size = 0x4, offset = 0x4, fixed_abs, tag = 'smem constant byte address 0x4 - core index']
  #allocation1 [shape = 'u32[144,128]{1,0:T(1,128)}', space=vmem, size = 0x12000, scoped, tag = 'internal scratch']
  %s0 = inlined_call_operand.hbm [shape: f32[8,8], index: 0, kind: input, shape index: {}]
  %s1 = inlined_call_operand.hbm [shape: f32[136,384], index: 1, kind: input, shape index: {}]
  %s2 = inlined_call_operand.vmem [shape: f32[1,640], index: 2, kind: input, shape index: {}]
  %s3 = inlined_call_operand.hbm [shape: f32[8,256], index: 3, kind: output, shape index: {}]
  %s4 = sld [smem:[#allocation0]]
  $region30: #{tpu_custom_call.1} parent=0
    _
  %s6 = ssub.s32 1, %s4
  %s7 = scalar_select 0, %s6, %s4
  $region1: #{tpu_custom_call.1} parent=0
    #allocation2 [shape = 'u8[4096]{0}', space=vmem, size = 0x1000, scoped, tag = 'input window, operand 0, single buffered']
    #allocation3 [shape = 's32[1]{0}', space=sflag, size = 0x4, scoped, tag = 'scoped memory for tpu_custom_call.1']
    #allocation4 [shape = 's32[1]{0}', space=sflag, size = 0x4, scoped, tag = 'scoped memory for tpu_custom_call.1']
    #allocation5 [shape = 'u8[208896]{0}', space=vmem, size = 0x33000, scoped, tag = 'input window, operand 1, single buffered']
    #allocation6 [shape = 's32[1]{0}', space=sflag, size = 0x4, scoped, tag = 'scoped memory for tpu_custom_call.1']
    #allocation7 [shape = 'u8[8192]{0}', space=vmem, size = 0x2000, scoped, tag = 'output window, operand 0, single buffered']
    %8 = vsyncpa [#allocation3], 0
    %9 = vsyncpa [#allocation6], 0
    %10 = vsyncpa [#allocation4], 0
    // Predicated region
    $region2: #{tpu_custom_call.1} parent=1 // pred_check
      _
    $region3: #{tpu_custom_call.1} parent=1 // pred_check_branch
      %12 = sbr.rel (0) target = $region5
    $region4: #{tpu_custom_call.1} parent=1 // pred_region
      %s14 = ssub.s32 128, 128
      %15 = vsyncadd [#allocation3], %s14
      %s17 = sshll.u32 [#allocation2], 4
      %s18 = int_to_ptr.vmem [resolvable:$true] %s17
      %20 = dma.hbm_to_vmem [thread:$0]  %s0, 128, %s18, [#allocation3]
    $region5: #{tpu_custom_call.1} parent=1 // pred_fallthru
      _
    // Predicated region
    $region6: #{tpu_custom_call.1} parent=1 // pred_check
      _
    $region7: #{tpu_custom_call.1} parent=1 // pred_check_branch
      %22 = sbr.rel (0) target = $region9
    $region8: #{tpu_custom_call.1} parent=1 // pred_region
      %s24 = ssub.s32 6528, 6528
      %25 = vsyncadd [#allocation6], %s24
      %s26 = sshll.u32 [#allocation5], 4
      %s27 = int_to_ptr.vmem [resolvable:$true] %s26
      %32 = dma.hbm_to_vmem [thread:$0]  %s1, 6528, %s27, [#allocation6], 384, 384, 24
    $region9: #{tpu_custom_call.1} parent=1 // pred_fallthru
      _
    // Predicated region
    $region10: #{tpu_custom_call.1} parent=1 // pred_check
      _
    $region11: #{tpu_custom_call.1} parent=1 // pred_check_branch
      %34 = sbr.rel (0) target = $region13
    $region12: #{tpu_custom_call.1} parent=1 // pred_region
      _
    $region13: #{tpu_custom_call.1} parent=1 // pred_fallthru
      _
    // Predicated region
    $region14: #{tpu_custom_call.1} parent=1 // pred_check
      _
    $region15: #{tpu_custom_call.1} parent=1 // pred_check_branch
      %36 = sbr.rel (0) target = $region17
    $region16: #{tpu_custom_call.1} parent=1 // pred_region
      %37 = dma.done [#allocation3], 128
    $region17: #{tpu_custom_call.1} parent=1 // pred_fallthru
      _
    // Predicated region
    $region18: #{tpu_custom_call.1} parent=1 // pred_check
      _
    $region19: #{tpu_custom_call.1} parent=1 // pred_check_branch
      %39 = sbr.rel (0) target = $region21
    $region20: #{tpu_custom_call.1} parent=1 // pred_region
      %40 = dma.done [#allocation6], 6528
    $region21: #{tpu_custom_call.1} parent=1 // pred_fallthru
      _
    %v41 = vld [vmem:[%s2] sm:$0x1]
    %v42 = vld [vmem:[%s2 + $0x1] sm:$0x1]
    %v43 = vld [vmem:[%s2 + $0x2] sm:$0x1]
    %v44 = vld [vmem:[%s2 + $0x3] sm:$0x3]
    %v45 = vld [vmem:[#allocation5] sm:$0xff]
    %v46 = vld [vmem:[#allocation5 + $0x18] sm:$0xff]
    %v47 = vld [vmem:[#allocation5 + $0x30] sm:$0xff]
    %v48 = vld [vmem:[#allocation5 + $0x48] sm:$0xff]
    %v49 = vld [vmem:[#allocation5 + $0x60] sm:$0xff]
    %v50 = vld [vmem:[#allocation5 + $0x78] sm:$0xff]
    %v51 = vld [vmem:[#allocation5 + $0x90] sm:$0xff]
    %v52 = vld [vmem:[#allocation5 + $0xa8] sm:$0xff]
    %v53 = vld [vmem:[#allocation5 + $0xc0] sm:$0xff]
    %v54 = vld [vmem:[#allocation5 + $0xd8] sm:$0xff]
    %v55 = vld [vmem:[#allocation5 + $0xf0] sm:$0xff]
    %v56 = vld [vmem:[#allocation5 + $0x108] sm:$0xff]
    %v57 = vld [vmem:[#allocation5 + $0x120] sm:$0xff]
    %v58 = vld [vmem:[#allocation5 + $0x138] sm:$0xff]
    %v59 = vld [vmem:[#allocation5 + $0x150] sm:$0xff]
    %v60 = vld [vmem:[#allocation5 + $0x168] sm:$0xff]
    %v61 = vld [vmem:[#allocation5 + $0x180] sm:$0xff]
    %v62 = vld [vmem:[#allocation5 + $0x20] sm:$0xff]
    %v63 = vld [vmem:[#allocation5 + $0x28] sm:$0xff]
    %v64 = vld [vmem:[#allocation5 + $0x38] sm:$0xff]
    %v65 = vld [vmem:[#allocation5 + $0x40] sm:$0xff]
    %v66 = vld [vmem:[#allocation5 + $0x50] sm:$0xff]
    %v67 = vld [vmem:[#allocation5 + $0x58] sm:$0xff]
    %v68 = vld [vmem:[#allocation5 + $0x68] sm:$0xff]
    %v69 = vld [vmem:[#allocation5 + $0x70] sm:$0xff]
    %v70 = vld [vmem:[#allocation5 + $0x80] sm:$0xff]
    %v71 = vld [vmem:[#allocation5 + $0x88] sm:$0xff]
    %v72 = vld [vmem:[#allocation5 + $0x98] sm:$0xff]
    %v73 = vld [vmem:[#allocation5 + $0xa0] sm:$0xff]
    %v74 = vld [vmem:[#allocation5 + $0xb0] sm:$0xff]
    %v75 = vld [vmem:[#allocation5 + $0xb8] sm:$0xff]
    %v76 = vld [vmem:[#allocation5 + $0xc8] sm:$0xff]
    %v77 = vld [vmem:[#allocation5 + $0xd0] sm:$0xff]
    %v78 = vld [vmem:[#allocation5 + $0xe0] sm:$0xff]
    %v79 = vld [vmem:[#allocation5 + $0xe8] sm:$0xff]
    %v80 = vld [vmem:[#allocation5 + $0xf8] sm:$0xff]
    %v81 = vld [vmem:[#allocation5 + $0x100] sm:$0xff]
    %v82 = vld [vmem:[#allocation5 + $0x110] sm:$0xff]
    %v83 = vld [vmem:[#allocation5 + $0x118] sm:$0xff]
    %v84 = vld [vmem:[#allocation5 + $0x128] sm:$0xff]
    %v85 = vld [vmem:[#allocation5 + $0x130] sm:$0xff]
    %v86 = vld [vmem:[#allocation5 + $0x140] sm:$0xff]
    %v87 = vld [vmem:[#allocation5 + $0x148] sm:$0xff]
    %v88 = vld [vmem:[#allocation5 + $0x158] sm:$0xff]
    %v89 = vld [vmem:[#allocation5 + $0x160] sm:$0xff]
    %v90 = vld [vmem:[#allocation5 + $0x170] sm:$0xff]
    %v91 = vld [vmem:[#allocation5 + $0x178] sm:$0xff]
    %v92 = vld [vmem:[#allocation5 + $0x188] sm:$0xff]
    %v93 = vld [vmem:[#allocation5 + $0x190] sm:$0xff]
    %v94 = vld [vmem:[#allocation2] sm:$0xff]
    %vm95 = vcmask 64512
    %v97 = vsel %vm95, %v94, 0
    %99 = vmatprep.subr.mxu0 0.0
    %100 = vmatpush1.msra.mxu0 %v45
    %101 = vmatprep.subr.mxu0 0.0
    %102 = vmatpush1.msra.mxu0 0.0
    %103 = vmatprep.subr.mxu0 0.0
    %104 = vmatpush1.msra.mxu0 0.0
    %105 = vmatprep.subr.mxu0 0.0
    %106 = vmatpush1.msra.mxu0 0.0
    %107 = vmatprep.subr.mxu0 0.0
    %108 = vmatpush1.msra.mxu0 0.0
    %109 = vmatprep.subr.mxu0 0.0
    %110 = vmatpush1.msra.mxu0 0.0
    %111 = vmatprep.subr.mxu0 0.0
    %112 = vmatpush1.msra.mxu0 0.0
    %113 = vmatprep.subr.mxu0 0.0
    %114 = vmatpush1.msra.mxu0 0.0
    %115 = vmatprep.subr.mxu0 0.0
    %116 = vmatpush1.msra.mxu0 0.0
    %117 = vmatprep.subr.mxu0 0.0
    %118 = vmatpush1.msra.mxu0 0.0
    %119 = vmatprep.subr.mxu0 0.0
    %120 = vmatpush1.msra.mxu0 0.0
    %121 = vmatprep.subr.mxu0 0.0
    %122 = vmatpush1.msra.mxu0 0.0
    %123 = vmatprep.subr.mxu0 0.0
    %124 = vmatpush1.msra.mxu0 0.0
    %125 = vmatprep.subr.mxu0 0.0
    %126 = vmatpush1.msra.mxu0 0.0
    %127 = vmatprep.subr.mxu0 0.0
    %128 = vmatpush1.msra.mxu0 0.0
    %129 = vmatprep.subr.mxu0 0.0
    %130 = vmatpush1.msra.mxu0 0.0
    %131 = vmatprep.subr.mxu0 0.0
    %132 = vmatpush1.msra.mxu0 0.0
    %133 = vmatprep.subr.mxu0 0.0
    %134 = vmatpush1.msra.mxu0 0.0
    %135 = vmatprep.subr.mxu0 0.0
    %136 = vmatpush1.msra.mxu0 0.0
    %137 = vmatprep.subr.mxu0 0.0
    %138 = vmatpush1.msra.mxu0 0.0
    %139 = vmatprep.subr.mxu0 0.0
    %140 = vmatpush1.msra.mxu0 0.0
    %141 = vmatprep.subr.mxu0 0.0
    %142 = vmatpush1.msra.mxu0 0.0
    %143 = vmatprep.subr.mxu0 0.0
    %144 = vmatpush1.msra.mxu0 0.0
    %145 = vmatprep.subr.mxu0 0.0
    %146 = vmatpush1.msra.mxu0 0.0
    %147 = vmatprep.subr.mxu0 0.0
    %148 = vmatpush1.msra.mxu0 0.0
    %149 = vmatprep.subr.mxu0 0.0
    %150 = vmatpush1.msra.mxu0 0.0
    %151 = vmatprep.subr.mxu0 0.0
    %152 = vmatpush1.msra.mxu0 0.0
    %153 = vmatprep.subr.mxu0 0.0
    %154 = vmatpush1.msra.mxu0 0.0
    %155 = vmatprep.subr.mxu0 0.0
    %156 = vmatpush1.msra.mxu0 0.0
    %157 = vmatprep.subr.mxu0 0.0
    %158 = vmatpush1.msra.mxu0 0.0
    %159 = vmatprep.subr.mxu0 0.0
    %160 = vmatpush1.msra.mxu0 0.0
    %161 = vmatprep.subr.mxu0 0.0
    %162 = vmatpush1.msra.mxu0 0.0
    %163 = vmatprep.mubr.f32.mxu0 0.0
    %164 = vmatmul.mubr.f32.gmra.mrb[0].mxu0 %v97
    %v165 = vpop.f32.mrb[0].mxu0
    %v166 = vadd.f32 0.0, %v165
    %v167 = vpop.f32.mrb[0].mxu0
    %168 = vdwg.mxu0
    %v170 = vlaneseq
    %v171 = vshrl.u32 %v170, 7
    %v172 = vsub.s32 0, %v171
    %v173 = vrot.slane %v41, %v172
    %v175 = vmul.f32 %v173, %v166
    %v176 = vxor.u32 %v175, 2147483648
    %v177 = vmul.f32 %v176, 1.442695
    %v178 = vpow.pop %v177
    %v179 = vadd.f32 %v178, 1.0
    %v180 = vrcp.pop %v179
    %v181 = vmul.f32 1.0, %v180
    %v182 = vmul.f32 %v166, %v181
    %v183 = vrot.slane %v182, 4
    %v184 = vadd.f32 %v182, %v183
    %v185 = vrot.slane %v184, 2
    %v186 = vadd.f32 %v184, %v185
    %v187 = vrot.slane %v186, 1
    %v188 = vadd.f32 %v186, %v187
    %v189 = vmul.f32 %v188, 0.125
    %v190 = vsub.f32 %v182, %v189
    %v191 = vmul.f32 %v190, %v190
    %v192 = vrot.slane %v191, 4
    %v193 = vadd.f32 %v191, %v192
    %v194 = vrot.slane %v193, 2
    %v195 = vadd.f32 %v193, %v194
    %v196 = vrot.slane %v195, 1
    %v197 = vadd.f32 %v195, %v196
    %v198 = vmul.f32 %v197, 0.125
    %v199 = vadd.f32 %v198, 1e-05
    %v200 = vrsqrt.pop %v199
    %v201 = vmul.f32 %v190, %v200
    %v203 = vlaneseq
    %v204 = vshrl.u32 %v203, 7
    %v205 = vsub.s32 0, %v204
    %v206 = vrot.slane %v42, %v205
    %208 = vmatprep.subr.mxu0 0.0
    %209 = vmatpush1.msra.mxu0 %v46
    %210 = vmatprep.subr.mxu0 0.0
    %211 = vmatpush1.msra.mxu0 %v47
    %212 = vmatprep.subr.mxu0 0.0
    %213 = vmatpush1.msra.mxu0 %v48
    %214 = vmatprep.subr.mxu0 0.0
    %215 = vmatpush1.msra.mxu0 %v49
    %216 = vmatprep.subr.mxu0 0.0
    %217 = vmatpush1.msra.mxu0 %v50
    %218 = vmatprep.subr.mxu0 0.0
    %219 = vmatpush1.msra.mxu0 %v51
    %220 = vmatprep.subr.mxu0 0.0
    %221 = vmatpush1.msra.mxu0 %v52
    %222 = vmatprep.subr.mxu0 0.0
    %223 = vmatpush1.msra.mxu0 %v53
    %224 = vmatprep.subr.mxu0 0.0
    %225 = vmatpush1.msra.mxu0 %v54
    %226 = vmatprep.subr.mxu0 0.0
    %227 = vmatpush1.msra.mxu0 %v55
    %228 = vmatprep.subr.mxu0 0.0
    %229 = vmatpush1.msra.mxu0 %v56
    %230 = vmatprep.subr.mxu0 0.0
    %231 = vmatpush1.msra.mxu0 %v57
    %232 = vmatprep.subr.mxu0 0.0
    %233 = vmatpush1.msra.mxu0 %v58
    %234 = vmatprep.subr.mxu0 0.0
    %235 = vmatpush1.msra.mxu0 %v59
    %236 = vmatprep.subr.mxu0 0.0
    %237 = vmatpush1.msra.mxu0 %v60
    %238 = vmatprep.subr.mxu0 0.0
    %239 = vmatpush1.msra.mxu0 %v61
    %240 = vmatprep.subr.mxu0 0.0
    %241 = vmatpush1.msra.mxu0 0.0
    %242 = vmatprep.subr.mxu0 0.0
    %243 = vmatpush1.msra.mxu0 0.0
    %244 = vmatprep.subr.mxu0 0.0
    %245 = vmatpush1.msra.mxu0 0.0
    %246 = vmatprep.subr.mxu0 0.0
    %247 = vmatpush1.msra.mxu0 0.0
    %248 = vmatprep.subr.mxu0 0.0
    %249 = vmatpush1.msra.mxu0 0.0
    %250 = vmatprep.subr.mxu0 0.0
    %251 = vmatpush1.msra.mxu0 0.0
    %252 = vmatprep.subr.mxu0 0.0
    %253 = vmatpush1.msra.mxu0 0.0
    %254 = vmatprep.subr.mxu0 0.0
    %255 = vmatpush1.msra.mxu0 0.0
    %256 = vmatprep.subr.mxu0 0.0
    %257 = vmatpush1.msra.mxu0 0.0
    %258 = vmatprep.subr.mxu0 0.0
    %259 = vmatpush1.msra.mxu0 0.0
    %260 = vmatprep.subr.mxu0 0.0
    %261 = vmatpush1.msra.mxu0 0.0
    %262 = vmatprep.subr.mxu0 0.0
    %263 = vmatpush1.msra.mxu0 0.0
    %264 = vmatprep.subr.mxu0 0.0
    %265 = vmatpush1.msra.mxu0 0.0
    %266 = vmatprep.subr.mxu0 0.0
    %267 = vmatpush1.msra.mxu0 0.0
    %268 = vmatprep.subr.mxu0 0.0
    %269 = vmatpush1.msra.mxu0 0.0
    %270 = vmatprep.subr.mxu0 0.0
    %271 = vmatpush1.msra.mxu0 0.0
    %272 = vmatprep.mubr.f32.mxu0 0.0
    %273 = vmatmul.mubr.f32.gmra.mrb[0].mxu0 %v201
    %v274 = vpop.f32.mrb[0].mxu0
    %v275 = vadd.f32 %v206, %v274
    %v276 = vpop.f32.mrb[0].mxu0
    %277 = vdwg.mxu0
    %v279 = vlaneseq
    %v280 = vshrl.u32 %v279, 7
    %v281 = vsub.s32 0, %v280
    %v282 = vrot.slane %v43, %v281
    %v284 = vmul.f32 %v282, %v275
    %v285 = vxor.u32 %v284, 2147483648
    %v286 = vmul.f32 %v285, 1.442695
    %v287 = vpow.pop %v286
    %v288 = vadd.f32 %v287, 1.0
    %v289 = vrcp.pop %v288
    %v290 = vmul.f32 1.0, %v289
    %v291 = vmul.f32 %v275, %v290
    %v292 = vrot.slane %v291, 4
    %v293 = vadd.f32 %v291, %v292
    %v294 = vrot.slane %v293, 2
    %v295 = vadd.f32 %v293, %v294
    %v296 = vrot.slane %v295, 1
    %v297 = vadd.f32 %v295, %v296
    %v298 = vmul.f32 %v297, 0.125
    %v299 = vsub.f32 %v291, %v298
    %v300 = vmul.f32 %v299, %v299
    %v301 = vrot.slane %v300, 4
    %v302 = vadd.f32 %v300, %v301
    %v303 = vrot.slane %v302, 2
    %v304 = vadd.f32 %v302, %v303
    %v305 = vrot.slane %v304, 1
    %v306 = vadd.f32 %v304, %v305
    %v307 = vmul.f32 %v306, 0.125
    %v308 = vadd.f32 %v307, 1e-05
    %v309 = vrsqrt.pop %v308
    %v310 = vmul.f32 %v299, %v309
    %v312 = vlaneseq
    %v313 = vshrl.u32 %v312, 7
    %v314 = vsub.s32 0, %v313
    %v315 = vrot.slane %v44, %v314
    %v316 = vlaneseq
    %v317 = vshrl.u32 %v316, 7
    %v318 = vsub.s32 1, %v317
    %v319 = vrot.slane %v44, %v318
    %322 = vmatprep.subr.mxu0 %v63
    %323 = vmatpush1.msra.mxu0 %v62
    %324 = vmatprep.subr.mxu0 %v65
    %325 = vmatpush1.msra.mxu0 %v64
    %326 = vmatprep.subr.mxu0 %v67
    %327 = vmatpush1.msra.mxu0 %v66
    %328 = vmatprep.subr.mxu0 %v69
    %329 = vmatpush1.msra.mxu0 %v68
    %330 = vmatprep.subr.mxu0 %v71
    %331 = vmatpush1.msra.mxu0 %v70
    %332 = vmatprep.subr.mxu0 %v73
    %333 = vmatpush1.msra.mxu0 %v72
    %334 = vmatprep.subr.mxu0 %v75
    %335 = vmatpush1.msra.mxu0 %v74
    %336 = vmatprep.subr.mxu0 %v77
    %337 = vmatpush1.msra.mxu0 %v76
    %338 = vmatprep.subr.mxu0 %v79
    %339 = vmatpush1.msra.mxu0 %v78
    %340 = vmatprep.subr.mxu0 %v81
    %341 = vmatpush1.msra.mxu0 %v80
    %342 = vmatprep.subr.mxu0 %v83
    %343 = vmatpush1.msra.mxu0 %v82
    %344 = vmatprep.subr.mxu0 %v85
    %345 = vmatpush1.msra.mxu0 %v84
    %346 = vmatprep.subr.mxu0 %v87
    %347 = vmatpush1.msra.mxu0 %v86
    %348 = vmatprep.subr.mxu0 %v89
    %349 = vmatpush1.msra.mxu0 %v88
    %350 = vmatprep.subr.mxu0 %v91
    %351 = vmatpush1.msra.mxu0 %v90
    %352 = vmatprep.subr.mxu0 %v93
    %353 = vmatpush1.msra.mxu0 %v92
    %354 = vmatprep.subr.mxu0 0.0
    %355 = vmatpush1.msra.mxu0 0.0
    %356 = vmatprep.subr.mxu0 0.0
    %357 = vmatpush1.msra.mxu0 0.0
    %358 = vmatprep.subr.mxu0 0.0
    %359 = vmatpush1.msra.mxu0 0.0
    %360 = vmatprep.subr.mxu0 0.0
    %361 = vmatpush1.msra.mxu0 0.0
    %362 = vmatprep.subr.mxu0 0.0
    %363 = vmatpush1.msra.mxu0 0.0
    %364 = vmatprep.subr.mxu0 0.0
    %365 = vmatpush1.msra.mxu0 0.0
    %366 = vmatprep.subr.mxu0 0.0
    %367 = vmatpush1.msra.mxu0 0.0
    %368 = vmatprep.subr.mxu0 0.0
    %369 = vmatpush1.msra.mxu0 0.0
    %370 = vmatprep.subr.mxu0 0.0
    %371 = vmatpush1.msra.mxu0 0.0
    %372 = vmatprep.subr.mxu0 0.0
    %373 = vmatpush1.msra.mxu0 0.0
    %374 = vmatprep.subr.mxu0 0.0
    %375 = vmatpush1.msra.mxu0 0.0
    %376 = vmatprep.subr.mxu0 0.0
    %377 = vmatpush1.msra.mxu0 0.0
    %378 = vmatprep.subr.mxu0 0.0
    %379 = vmatpush1.msra.mxu0 0.0
    %380 = vmatprep.subr.mxu0 0.0
    %381 = vmatpush1.msra.mxu0 0.0
    %382 = vmatprep.subr.mxu0 0.0
    %383 = vmatpush1.msra.mxu0 0.0
    %384 = vmatprep.subr.mxu0 0.0
    %385 = vmatpush1.msra.mxu0 0.0
    %386 = vmatprep.mubr.f32.mxu0 0.0
    %387 = vmatmul.mubr.f32.gmra.mrb[0].mxu0 %v310
    %v388 = vpop.f32.mrb[0].mxu0
    %v389 = vadd.f32 %v315, %v388
    %v390 = vpop.f32.mrb[0].mxu0
    %v391 = vadd.f32 %v319, %v390
    %392 = vdwg.mxu0
    %v393 = vmax.f32 %v389, 0.0
    %v394 = vmax.f32 %v391, 0.0
    %395 = vst [vmem:[#allocation7] sm:$0xff] %v393
    %396 = vst [vmem:[#allocation7 + $0x8] sm:$0xff] %v394
    // Predicated region
    $region22: #{tpu_custom_call.1} parent=1 // pred_check
      _
    $region23: #{tpu_custom_call.1} parent=1 // pred_check_branch
      %398 = sbr.rel (0) target = $region25
    $region24: #{tpu_custom_call.1} parent=1 // pred_region
      %s400 = ssub.s32 256, 256
      %401 = vsyncadd [#allocation4], %s400
      %s403 = sshll.u32 [#allocation7], 4
      %s404 = int_to_ptr.vmem [resolvable:$true] %s403
      %406 = dma.vmem_to_hbm [thread:$0]  %s404, 256, %s3, [#allocation4]
    $region25: #{tpu_custom_call.1} parent=1 // pred_fallthru
      _
    // Predicated region
    $region26: #{tpu_custom_call.1} parent=1 // pred_check
      _
    $region27: #{tpu_custom_call.1} parent=1 // pred_check_branch
      %408 = sbr.rel (0) target = $region29
    $region28: #{tpu_custom_call.1} parent=1 // pred_region
      %409 = dma.done [#allocation4], 256
    $region29: #{tpu_custom_call.1} parent=1 // pred_fallthru
      _
    %410 = vsyncpa [#allocation3], 1
    %411 = vsyncpa [#allocation6], 1
    %412 = vsyncpa [#allocation4], 1

</llo_original>
